<compile_context>
chip_gen: v7x
topology: tpu7x:2x2x1
jax: 0.10.0
libtpu: 0.0.40
codegen_flags: <defaults>
</compile_context>

<pallas_src>
import numpy as np
import jax
import jax.numpy as jnp
from jax.experimental import pallas as pl
from jax.experimental.pallas import tpu as pltpu

D_MODEL = 64


def head_kernel(x_ref, w_ref, b_ref, out_ref):
    # x_ref : (1, BT, D)  -- only the last time step (selected by BlockSpec)
    # w_ref : (D, 1)      -- fc weight, pre-transposed to (in, out)
    # b_ref : (1, 1)      -- fc bias
    # out   : (BT, 1)
    last = x_ref[0]                                               # (BT, D)
    out_ref[...] = (
        jnp.dot(last, w_ref[...], preferred_element_type=jnp.float32)
        + b_ref[...]
    )


def classification_head(x_tbd, fc_weight, fc_bias):
    """x_tbd: (T, B, D) f32.  fc_weight: (1, D) (torch layout), fc_bias: (1,).

    Returns logits: (B,) f32.
    """
    T, B, D = x_tbd.shape
    wt = jnp.asarray(fc_weight, jnp.float32).reshape(1, D).T      # (D, 1)
    b2 = jnp.asarray(fc_bias, jnp.float32).reshape(1, 1)          # (1, 1)

    # Batch tile: prefer a multiple-of-8 tile that gives >= 2 grid steps
    # (megacore sharding on v7x); otherwise use the whole batch in one step.
    bt = B
    for cand in (256, 128, 64, 32, 16, 8):
        if B % cand == 0 and B // cand >= 2:
            bt = cand
            break
    grid = (B // bt,)

    out = pl.pallas_call(
        head_kernel,
        out_shape=jax.ShapeDtypeStruct((B, 1), jnp.float32),
        grid=grid,
        in_specs=[
            # Only the last time step of x is fetched into VMEM.
            pl.BlockSpec((1, bt, D), lambda i: (T - 1, i, 0)),
            pl.BlockSpec((D, 1), lambda i: (0, 0)),
            pl.BlockSpec((1, 1), lambda i: (0, 0)),
        ],
        out_specs=pl.BlockSpec((bt, 1), lambda i: (i, 0)),
        compiler_params=pltpu.CompilerParams(
            dimension_semantics=("parallel",)),
    )(x_tbd, wt, b2)
    return out[:, 0]


if __name__ == "__main__":
    key = jax.random.PRNGKey(0)
    kx, kw, kb = jax.random.split(key, 3)

    T, B = 8, 2
    x = jax.random.normal(kx, (T, B, D_MODEL), jnp.float32)
    fc_weight = jax.random.normal(kw, (1, D_MODEL), jnp.float32) * 0.05
    fc_bias = jax.random.normal(kb, (1,), jnp.float32) * 0.05

    logits = jax.block_until_ready(classification_head(x, fc_weight, fc_bias))
    assert logits.shape == (B,), logits.shape

    # Pure-JAX reference (exact f32 elementwise multiply + reduce).
    ref = jnp.sum(x[-1] * fc_weight[0], axis=-1) + fc_bias[0]
    np.testing.assert_allclose(np.asarray(logits), np.asarray(ref),
                               rtol=1e-3, atol=1e-4)

    print("KERNEL_OK")
</pallas_src>

<mosaic_0001>
module attributes {stable_mosaic.version = 11 : i64} {
  func.func @head_kernel(%arg0: i32, %arg1: memref<1x2x64xf32, #tpu.memory_space<vmem>>, %arg2: memref<64x1xf32, #tpu.memory_space<vmem>>, %arg3: memref<1x1xf32, #tpu.memory_space<vmem>>, %arg4: memref<2x1xf32, #tpu.memory_space<vmem>>) attributes {dimension_semantics = [#tpu.dimension_semantics<parallel>], iteration_bounds = array<i64: 1>, scalar_prefetch = 0 : i64, scratch_operands = 0 : i64, tpu.core_type = #tpu.core_type<tc>, window_params = [{transform_indices = @transform_0, window_bounds = array<i64: 1, 2, 64>}, {pipeline_mode = #tpu.pipeline_mode<synchronous>, transform_indices = @transform_1, window_bounds = array<i64: 64, 1>}, {pipeline_mode = #tpu.pipeline_mode<synchronous>, transform_indices = @transform_2, window_bounds = array<i64: 1, 1>}, {transform_indices = @transform_3, window_bounds = array<i64: 2, 1>}]} {
    %c0 = arith.constant 0 : index
    %c0_0 = arith.constant 0 : index
    %c0_1 = arith.constant 0 : index
    %0 = vector.load %arg1[%c0, %c0_0, %c0_1] : memref<1x2x64xf32, #tpu.memory_space<vmem>>, vector<1x2x64xf32>
    %1 = vector.shape_cast %0 : vector<1x2x64xf32> to vector<2x64xf32>
    %c0_2 = arith.constant 0 : index
    %c0_3 = arith.constant 0 : index
    %2 = vector.load %arg2[%c0_2, %c0_3] : memref<64x1xf32, #tpu.memory_space<vmem>>, vector<64x1xf32>
    %cst = arith.constant dense<0.000000e+00> : vector<2x1xf32>
    %3 = tpu.matmul %1, %2, %cst {dimension_numbers = #tpu.dot_dimension_numbers<[1], [0], [0], [1], [0, 0, 1, 1], [], []>} : vector<2x64xf32>, vector<64x1xf32>, vector<2x1xf32> -> vector<2x1xf32>
    %c0_4 = arith.constant 0 : index
    %c0_5 = arith.constant 0 : index
    %4 = vector.load %arg3[%c0_4, %c0_5] : memref<1x1xf32, #tpu.memory_space<vmem>>, vector<1x1xf32>
    %5 = vector.broadcast %4 : vector<1x1xf32> to vector<2x1xf32>
    %6 = arith.addf %3, %5 : vector<2x1xf32>
    %c0_6 = arith.constant 0 : index
    %c0_7 = arith.constant 0 : index
    %7 = vector.load %arg4[%c0_6, %c0_7] : memref<2x1xf32, #tpu.memory_space<vmem>>, vector<2x1xf32>
    tpu.vector_store %arg4[%c0_6, %c0_7], %6 {strides = array<i32>} : memref<2x1xf32, #tpu.memory_space<vmem>>, vector<2x1xf32>,
    return
  }
  func.func @transform_0(%arg0: i32) -> (i32, i32, i32) {
    %c7_i32 = arith.constant 7 : i32
    %c0_i32 = arith.constant 0 : i32
    %c0_i32_0 = arith.constant 0 : i32
    return %c7_i32, %arg0, %c0_i32 : i32, i32, i32
  }
  func.func @transform_1(%arg0: i32) -> (i32, i32) {
    %c0_i32 = arith.constant 0 : i32
    %c0_i32_0 = arith.constant 0 : i32
    %c0_i32_1 = arith.constant 0 : i32
    return %c0_i32, %c0_i32_0 : i32, i32
  }
  func.func @transform_2(%arg0: i32) -> (i32, i32) {
    %c0_i32 = arith.constant 0 : i32
    %c0_i32_0 = arith.constant 0 : i32
    %c0_i32_1 = arith.constant 0 : i32
    return %c0_i32, %c0_i32_0 : i32, i32
  }
  func.func @transform_3(%arg0: i32) -> (i32, i32) {
    %c0_i32 = arith.constant 0 : i32
    %c0_i32_0 = arith.constant 0 : i32
    return %arg0, %c0_i32 : i32, i32
  }
}

</mosaic_0001>

<llo_original>
// kernel: tpu_custom_call.1
$region0: #{tpu_custom_call.1}
  #allocation0 [shape = 'u32[]', space=smem, size = 0x4, offset = 0x4, fixed_abs, tag = 'smem constant byte address 0x4 - core index']
  #allocation1 [shape = 'u32[144,128]{1,0:T(1,128)}', space=vmem, size = 0x12000, scoped, tag = 'internal scratch']
  #allocation2 [shape = 'f32[1,1]{1,0:T(1,128)S(1)}', space=vmem, size = 0x200, scoped, tag = 'scoped memory for tpu_custom_call.1']
  %s0 = inlined_call_operand.vmem [shape: f32[8,2,64], index: 0, kind: input, shape index: {}]
  %s1 = inlined_call_operand.vmem [shape: f32[64,1], index: 1, kind: input, shape index: {}]
  %s2 = inlined_call_operand.<no memory space> [shape: f32[1,1], index: 2, kind: input, shape index: {}]
  %s3 = inlined_call_operand.vmem [shape: f32[2,1], index: 3, kind: output, shape index: {}]
  %s4 = sld [smem:[#allocation0]]
  $region22: #{tpu_custom_call.1} parent=0
    _
  %s6 = ssub.s32 1, %s4
  %s7 = scalar_select 0, %s6, %s4
  %v8 = vstv %s2
  %9 = vst [vmem:[#allocation2] sm:$0x1] %v8
  // Predicated region
  $region2: #{tpu_custom_call.1} parent=0 // pred_check
    _
  $region3: #{tpu_custom_call.1} parent=0 // pred_check_branch
    %11 = sbr.rel (0) target = $region5
  $region4: #{tpu_custom_call.1} parent=0 // pred_region
    %s12 = scalar_lea.vmem %s0, 14
  $region5: #{tpu_custom_call.1} parent=0 // pred_fallthru
    _
  // Predicated region
  $region6: #{tpu_custom_call.1} parent=0 // pred_check
    _
  $region7: #{tpu_custom_call.1} parent=0 // pred_check_branch
    %14 = sbr.rel (0) target = $region9
  $region8: #{tpu_custom_call.1} parent=0 // pred_region
    _
  $region9: #{tpu_custom_call.1} parent=0 // pred_fallthru
    _
  // Predicated region
  $region10: #{tpu_custom_call.1} parent=0 // pred_check
    _
  $region11: #{tpu_custom_call.1} parent=0 // pred_check_branch
    %16 = sbr.rel (0) target = $region13
  $region12: #{tpu_custom_call.1} parent=0 // pred_region
    _
  $region13: #{tpu_custom_call.1} parent=0 // pred_fallthru
    _
  %s17 = scalar_lea.vmem %s0, 14
  %s18 = scalar_lea.vmem %s0, 14
  %v19 = vld [vmem:[%s18] sm:$0x3]
  %v20 = vld [vmem:[%s1] sm:$0xff]
  %v21 = vld [vmem:[%s1 + $0x8] sm:$0xff]
  %v22 = vld [vmem:[%s1 + $0x10] sm:$0xff]
  %v23 = vld [vmem:[%s1 + $0x18] sm:$0xff]
  %v24 = vld [vmem:[%s1 + $0x20] sm:$0xff]
  %v25 = vld [vmem:[%s1 + $0x28] sm:$0xff]
  %v26 = vld [vmem:[%s1 + $0x30] sm:$0xff]
  %v27 = vld [vmem:[%s1 + $0x38] sm:$0xff]
  %v28 = vld [vmem:[#allocation2] sm:$0x1]
  %v30 = vlaneseq
  %v31 = vshrl.u32 %v30, 7
  %v32 = vsub.s32 0, %v31
  %v33 = vrot.slane %v28, %v32
  %vm35 = vcmask 523264
  %v37 = vsel %vm35, %v19, 0
  %39 = vmatprep.subr.mxu0 0.0
  %40 = vmatpush1.msra.mxu0 %v20
  %41 = vmatprep.subr.mxu0 0.0
  %42 = vmatpush1.msra.mxu0 %v21
  %43 = vmatprep.subr.mxu0 0.0
  %44 = vmatpush1.msra.mxu0 %v22
  %45 = vmatprep.subr.mxu0 0.0
  %46 = vmatpush1.msra.mxu0 %v23
  %47 = vmatprep.subr.mxu0 0.0
  %48 = vmatpush1.msra.mxu0 %v24
  %49 = vmatprep.subr.mxu0 0.0
  %50 = vmatpush1.msra.mxu0 %v25
  %51 = vmatprep.subr.mxu0 0.0
  %52 = vmatpush1.msra.mxu0 %v26
  %53 = vmatprep.subr.mxu0 0.0
  %54 = vmatpush1.msra.mxu0 %v27
  %55 = vmatprep.subr.mxu0 0.0
  %56 = vmatpush1.msra.mxu0 0.0
  %57 = vmatprep.subr.mxu0 0.0
  %58 = vmatpush1.msra.mxu0 0.0
  %59 = vmatprep.subr.mxu0 0.0
  %60 = vmatpush1.msra.mxu0 0.0
  %61 = vmatprep.subr.mxu0 0.0
  %62 = vmatpush1.msra.mxu0 0.0
  %63 = vmatprep.subr.mxu0 0.0
  %64 = vmatpush1.msra.mxu0 0.0
  %65 = vmatprep.subr.mxu0 0.0
  %66 = vmatpush1.msra.mxu0 0.0
  %67 = vmatprep.subr.mxu0 0.0
  %68 = vmatpush1.msra.mxu0 0.0
  %69 = vmatprep.subr.mxu0 0.0
  %70 = vmatpush1.msra.mxu0 0.0
  %71 = vmatprep.subr.mxu0 0.0
  %72 = vmatpush1.msra.mxu0 0.0
  %73 = vmatprep.subr.mxu0 0.0
  %74 = vmatpush1.msra.mxu0 0.0
  %75 = vmatprep.subr.mxu0 0.0
  %76 = vmatpush1.msra.mxu0 0.0
  %77 = vmatprep.subr.mxu0 0.0
  %78 = vmatpush1.msra.mxu0 0.0
  %79 = vmatprep.subr.mxu0 0.0
  %80 = vmatpush1.msra.mxu0 0.0
  %81 = vmatprep.subr.mxu0 0.0
  %82 = vmatpush1.msra.mxu0 0.0
  %83 = vmatprep.subr.mxu0 0.0
  %84 = vmatpush1.msra.mxu0 0.0
  %85 = vmatprep.subr.mxu0 0.0
  %86 = vmatpush1.msra.mxu0 0.0
  %87 = vmatprep.subr.mxu0 0.0
  %88 = vmatpush1.msra.mxu0 0.0
  %89 = vmatprep.subr.mxu0 0.0
  %90 = vmatpush1.msra.mxu0 0.0
  %91 = vmatprep.subr.mxu0 0.0
  %92 = vmatpush1.msra.mxu0 0.0
  %93 = vmatprep.subr.mxu0 0.0
  %94 = vmatpush1.msra.mxu0 0.0
  %95 = vmatprep.subr.mxu0 0.0
  %96 = vmatpush1.msra.mxu0 0.0
  %97 = vmatprep.subr.mxu0 0.0
  %98 = vmatpush1.msra.mxu0 0.0
  %99 = vmatprep.subr.mxu0 0.0
  %100 = vmatpush1.msra.mxu0 0.0
  %101 = vmatprep.subr.mxu0 0.0
  %102 = vmatpush1.msra.mxu0 0.0
  %103 = vmatprep.mubr.f32.mxu0 0.0
  %104 = vmatmul.mubr.f32.gmra.mrb[0].mxu0 %v37
  %v105 = vpop.f32.mrb[0].mxu0
  %v106 = vadd.f32 %v33, %v105
  %v107 = vpop.f32.mrb[0].mxu0
  %108 = vdwg.mxu0
  %vm109 = vcmask 1024
  %110 = vst.msk [vmem:[%s3] sm:$0x3] %vm109, %v106
  // Predicated region
  $region14: #{tpu_custom_call.1} parent=0 // pred_check
    _
  $region15: #{tpu_custom_call.1} parent=0 // pred_check_branch
    %112 = sbr.rel (0) target = $region17
  $region16: #{tpu_custom_call.1} parent=0 // pred_region
    _
  $region17: #{tpu_custom_call.1} parent=0 // pred_fallthru
    _
  // Predicated region
  $region18: #{tpu_custom_call.1} parent=0 // pred_check
    _
  $region19: #{tpu_custom_call.1} parent=0 // pred_check_branch
    %114 = sbr.rel (0) target = $region21
  $region20: #{tpu_custom_call.1} parent=0 // pred_region
    _
  $region21: #{tpu_custom_call.1} parent=0 // pred_fallthru
    _

</llo_original>
